<compile_context>
chip_gen: v5e
topology: v5e:2x2
jax: 0.10.0
libtpu: 0.0.40
codegen_flags: <defaults>
</compile_context>

<pallas_src>
import jax
import jax.numpy as jnp
from jax import lax
from jax.experimental import pallas as pl
from jax.experimental.pallas import tpu as pltpu

IN_FEATURES = 256
OUT_FEATURES = 10
TOTAL_FEATURES = IN_FEATURES + OUT_FEATURES  # 266
INV_SQRT2 = 0.7071067811865476


def _round_up(x, m):
    return ((x + m - 1) // m) * m


def _model_kernel(x2_ref, wt_ref, b_ref, out_ref):
    # x2_ref : (TB, 256)   wt_ref : (256, 10)   b_ref : (1, 10)
    # out_ref: (TB, 266)  -- [:, :10] = v12, [:, 10:] = v6 (fused concat)
    x2 = x2_ref[...]

    # Elementwise erf-gate on x2:  v6 = v2*erf(v2/sqrt2) + v2
    v2 = x2 * 0.5
    v6 = v2 * lax.erf(v2 * INV_SQRT2) + v2

    # Linear branch: v7 = x2 @ W.T + b, then same erf gate.
    v7 = jnp.dot(x2, wt_ref[...], preferred_element_type=jnp.float32) + b_ref[...]
    v8 = v7 * 0.5
    v12 = v8 * lax.erf(v7 * INV_SQRT2) + v8

    out_ref[...] = jnp.concatenate(
        [v12.astype(out_ref.dtype), v6.astype(out_ref.dtype)], axis=1
    )


def model_forward(x1, x2, weight, bias, *, block_b=512):
    """x1, x2: (B, 256). weight: (10, 256). bias: (10,). Returns (B, 266)."""
    del x1  # v1 = linear(x1) is unused by the torch forward's return value.
    B = x2.shape[0]

    # Batch tile: multiple of 8 sublanes, at most block_b rows.
    tb = _round_up(min(block_b, _round_up(B, 8)), 8)
    b_pad = _round_up(B, tb)

    x2p = x2 if b_pad == B else jnp.pad(x2, ((0, b_pad - B), (0, 0)))
    wt = weight.T                       # (256, 10)
    b2d = bias.reshape(1, OUT_FEATURES)

    out = pl.pallas_call(
        _model_kernel,
        out_shape=jax.ShapeDtypeStruct((b_pad, TOTAL_FEATURES), jnp.float32),
        grid_spec=pltpu.PrefetchScalarGridSpec(
            num_scalar_prefetch=0,
            grid=(b_pad // tb,),
            in_specs=[
                pl.BlockSpec((tb, IN_FEATURES), lambda i: (i, 0)),
                # Weight / bias: constant index_map -> stays VMEM-resident.
                pl.BlockSpec((IN_FEATURES, OUT_FEATURES), lambda i: (0, 0)),
                pl.BlockSpec((1, OUT_FEATURES), lambda i: (0, 0)),
            ],
            out_specs=pl.BlockSpec((tb, TOTAL_FEATURES), lambda i: (i, 0)),
        ),
        compiler_params=pltpu.CompilerParams(
            dimension_semantics=("parallel",)
        ),
    )(x2p, wt, b2d)

    if b_pad != B:
        out = out[:B]
    return out


def _reference(x1, x2, weight, bias):
    v7 = x2 @ weight.T + bias
    v12 = (v7 * 0.5) * (lax.erf(v7 * INV_SQRT2) + 1.0)
    v2 = x2 * 0.5
    v6 = v2 * (lax.erf(v2 * INV_SQRT2) + 1.0)
    return jnp.concatenate([v12, v6], axis=1)


if __name__ == "__main__":
    key = jax.random.PRNGKey(0)
    k1, k2, kw, kb = jax.random.split(key, 4)

    # Deterministic Linear(256, 10) parameters (Kaiming-uniform-like bound).
    bound = 1.0 / jnp.sqrt(jnp.float32(IN_FEATURES))
    weight = jax.random.uniform(
        kw, (OUT_FEATURES, IN_FEATURES), jnp.float32, -bound, bound)
    bias = jax.random.uniform(kb, (OUT_FEATURES,), jnp.float32, -bound, bound)

    # Case 1: the spec's shape (B=1).
    B = 1
    x1 = jax.random.normal(k1, (B, IN_FEATURES), dtype=jnp.float32)
    x2 = jax.random.normal(k2, (B, IN_FEATURES), dtype=jnp.float32)
    out = jax.block_until_ready(model_forward(x1, x2, weight, bias))
    ref = _reference(x1, x2, weight, bias)
    assert out.shape == (B, TOTAL_FEATURES), out.shape
    assert jnp.allclose(out, ref, atol=1e-5, rtol=1e-5), "mismatch (B=1)"

    # Case 2: small ragged batch to exercise tiling + padding (TB=8, grid=3).
    B2 = 20
    x1b = jax.random.normal(k1, (B2, IN_FEATURES), dtype=jnp.float32)
    x2b = jax.random.normal(k2, (B2, IN_FEATURES), dtype=jnp.float32)
    out2 = jax.block_until_ready(model_forward(x1b, x2b, weight, bias, block_b=8))
    ref2 = _reference(x1b, x2b, weight, bias)
    assert out2.shape == (B2, TOTAL_FEATURES), out2.shape
    assert jnp.allclose(out2, ref2, atol=1e-5, rtol=1e-5), "mismatch (B=20)"

    print("KERNEL_OK")
</pallas_src>

<mosaic_0001>
module attributes {stable_mosaic.version = 11 : i64} {
  func.func @_model_kernel(%arg0: i32, %arg1: memref<8x256xf32, #tpu.memory_space<vmem>>, %arg2: memref<256x10xf32, #tpu.memory_space<vmem>>, %arg3: memref<1x10xf32, #tpu.memory_space<vmem>>, %arg4: memref<8x266xf32, #tpu.memory_space<vmem>>) attributes {dimension_semantics = [#tpu.dimension_semantics<parallel>], iteration_bounds = array<i64: 1>, scalar_prefetch = 0 : i64, scratch_operands = 0 : i64, tpu.core_type = #tpu.core_type<tc>, window_params = [{transform_indices = @transform_0, window_bounds = array<i64: 8, 256>}, {pipeline_mode = #tpu.pipeline_mode<synchronous>, transform_indices = @transform_1, window_bounds = array<i64: 256, 10>}, {pipeline_mode = #tpu.pipeline_mode<synchronous>, transform_indices = @transform_2, window_bounds = array<i64: 1, 10>}, {transform_indices = @transform_3, window_bounds = array<i64: 8, 266>}]} {
    %c0 = arith.constant 0 : index
    %c0_0 = arith.constant 0 : index
    %0 = vector.load %arg1[%c0, %c0_0] : memref<8x256xf32, #tpu.memory_space<vmem>>, vector<8x256xf32>
    %cst = arith.constant 5.000000e-01 : f32
    %1 = vector.broadcast %cst : f32 to vector<8x256xf32>
    %2 = arith.mulf %0, %1 : vector<8x256xf32>
    %cst_1 = arith.constant 0.707106769 : f32
    %3 = vector.broadcast %cst_1 : f32 to vector<8x256xf32>
    %4 = arith.mulf %2, %3 : vector<8x256xf32>
    %5 = math.erf %4 : vector<8x256xf32>
    %6 = arith.mulf %2, %5 : vector<8x256xf32>
    %7 = arith.addf %6, %2 : vector<8x256xf32>
    %c0_2 = arith.constant 0 : index
    %c0_3 = arith.constant 0 : index
    %8 = vector.load %arg2[%c0_2, %c0_3] : memref<256x10xf32, #tpu.memory_space<vmem>>, vector<256x10xf32>
    %cst_4 = arith.constant dense<0.000000e+00> : vector<8x10xf32>
    %9 = tpu.matmul %0, %8, %cst_4 {dimension_numbers = #tpu.dot_dimension_numbers<[1], [0], [0], [1], [0, 0, 1, 1], [], []>} : vector<8x256xf32>, vector<256x10xf32>, vector<8x10xf32> -> vector<8x10xf32>
    %c0_5 = arith.constant 0 : index
    %c0_6 = arith.constant 0 : index
    %10 = vector.load %arg3[%c0_5, %c0_6] : memref<1x10xf32, #tpu.memory_space<vmem>>, vector<1x10xf32>
    %11 = vector.broadcast %10 : vector<1x10xf32> to vector<8x10xf32>
    %12 = arith.addf %9, %11 : vector<8x10xf32>
    %cst_7 = arith.constant 5.000000e-01 : f32
    %13 = vector.broadcast %cst_7 : f32 to vector<8x10xf32>
    %14 = arith.mulf %12, %13 : vector<8x10xf32>
    %cst_8 = arith.constant 0.707106769 : f32
    %15 = vector.broadcast %cst_8 : f32 to vector<8x10xf32>
    %16 = arith.mulf %12, %15 : vector<8x10xf32>
    %17 = math.erf %16 : vector<8x10xf32>
    %18 = arith.mulf %14, %17 : vector<8x10xf32>
    %19 = arith.addf %18, %14 : vector<8x10xf32>
    %20 = tpu.concatenate %19, %7 in 1 : vector<8x10xf32>, vector<8x256xf32> -> vector<8x266xf32>
    %c0_9 = arith.constant 0 : index
    %c0_10 = arith.constant 0 : index
    %21 = vector.load %arg4[%c0_9, %c0_10] : memref<8x266xf32, #tpu.memory_space<vmem>>, vector<8x266xf32>
    tpu.vector_store %arg4[%c0_9, %c0_10], %20 {strides = array<i32>} : memref<8x266xf32, #tpu.memory_space<vmem>>, vector<8x266xf32>,
    return
  }
  func.func @transform_0(%arg0: i32) -> (i32, i32) {
    %c0_i32 = arith.constant 0 : i32
    %c0_i32_0 = arith.constant 0 : i32
    return %arg0, %c0_i32 : i32, i32
  }
  func.func @transform_1(%arg0: i32) -> (i32, i32) {
    %c0_i32 = arith.constant 0 : i32
    %c0_i32_0 = arith.constant 0 : i32
    %c0_i32_1 = arith.constant 0 : i32
    return %c0_i32, %c0_i32_0 : i32, i32
  }
  func.func @transform_2(%arg0: i32) -> (i32, i32) {
    %c0_i32 = arith.constant 0 : i32
    %c0_i32_0 = arith.constant 0 : i32
    %c0_i32_1 = arith.constant 0 : i32
    return %c0_i32, %c0_i32_0 : i32, i32
  }
  func.func @transform_3(%arg0: i32) -> (i32, i32) {
    %c0_i32 = arith.constant 0 : i32
    %c0_i32_0 = arith.constant 0 : i32
    return %arg0, %c0_i32 : i32, i32
  }
}

</mosaic_0001>

<llo_original>
// kernel: tpu_custom_call.1
$region0: #{tpu_custom_call.1}
  #allocation0 [shape = 'u32[]', space=smem, size = 0x4, offset = 0x4, fixed_abs, tag = 'smem constant byte address 0x4 - core index']
  #allocation1 [shape = 'u32[72,128]{1,0:T(1,128)}', space=vmem, size = 0x9000, scoped, tag = 'internal scratch']
  %s0 = inlined_call_operand.vmem [shape: f32[8,256], index: 0, kind: input, shape index: {}]
  %s1 = inlined_call_operand.vmem [shape: f32[256,10], index: 1, kind: input, shape index: {}]
  %s2 = inlined_call_operand.vmem [shape: f32[1,10], index: 2, kind: input, shape index: {}]
  %s3 = inlined_call_operand.hbm [shape: f32[8,266], index: 3, kind: output, shape index: {}]
  %s4 = sld [smem:[#allocation0]]
  $region22: #{tpu_custom_call.1} parent=0
    _
  %s6 = ssub.s32 1, %s4
  %s7 = scalar_select 0, %s6, %s4
  $region1: #{tpu_custom_call.1} parent=0
    #allocation2 [shape = 'u8[12288]{0}', space=vmem, size = 0x3000, scoped, tag = 'output window, operand 0, single buffered']
    #allocation3 [shape = 's32[1]{0}', space=sflag, size = 0x4, scoped, tag = 'scoped memory for tpu_custom_call.1']
    %8 = vsyncpa [#allocation3], 0
    // Predicated region
    $region2: #{tpu_custom_call.1} parent=1 // pred_check
      _
    $region3: #{tpu_custom_call.1} parent=1 // pred_check_branch
      %10 = sbr.rel (0) target = $region5
    $region4: #{tpu_custom_call.1} parent=1 // pred_region
      _
    $region5: #{tpu_custom_call.1} parent=1 // pred_fallthru
      _
    // Predicated region
    $region6: #{tpu_custom_call.1} parent=1 // pred_check
      _
    $region7: #{tpu_custom_call.1} parent=1 // pred_check_branch
      %12 = sbr.rel (0) target = $region9
    $region8: #{tpu_custom_call.1} parent=1 // pred_region
      _
    $region9: #{tpu_custom_call.1} parent=1 // pred_fallthru
      _
    // Predicated region
    $region10: #{tpu_custom_call.1} parent=1 // pred_check
      _
    $region11: #{tpu_custom_call.1} parent=1 // pred_check_branch
      %14 = sbr.rel (0) target = $region13
    $region12: #{tpu_custom_call.1} parent=1 // pred_region
      _
    $region13: #{tpu_custom_call.1} parent=1 // pred_fallthru
      _
    %v15 = vld [vmem:[%s0] sm:$0xff]
    %v16 = vld [vmem:[%s0 + $0x8] sm:$0xff]
    %v17 = vmul.f32 %v15, 0.5
    %v18 = vmul.f32 %v16, 0.5
    %v19 = vmul.f32 %v17, 0.70710677
    %v20 = vmul.f32 %v18, 0.70710677
    %v21 = vmul.f32 %v19, %v19
    %v22 = vmin.f32 16.0, %v21
    %v23 = vmul.f32 %v22, 2.1237322e-06
    %v24 = vadd.f32 %v23, 0.00028619796
    %v25 = vmul.f32 %v22, %v24
    %v26 = vadd.f32 %v25, 0.0036580483
    %v27 = vmul.f32 %v22, %v26
    %v28 = vadd.f32 %v27, 0.05243302
    %v29 = vmul.f32 %v22, %v28
    %v30 = vadd.f32 %v29, 0.18741608
    %v31 = vmul.f32 %v22, %v30
    %v32 = vadd.f32 %v31, 1.1283791
    %v33 = vmul.f32 %v19, %v32
    %v34 = vmul.f32 %v22, 3.8918573e-05
    %v35 = vadd.f32 %v34, 0.001143296
    %v36 = vmul.f32 %v22, %v35
    %v37 = vadd.f32 %v36, 0.014752088
    %v38 = vmul.f32 %v22, %v37
    %v39 = vadd.f32 %v38, 0.112945676
    %v40 = vmul.f32 %v22, %v39
    %v41 = vadd.f32 %v40, 0.4994258
    %v42 = vmul.f32 %v22, %v41
    %v43 = vadd.f32 %v42, 1.0
    %v44 = vrcp.pop %v43
    %v45 = vmul.f32 %v43, %v44
    %v46 = vsub.f32 1.0, %v45
    %v47 = vmul.f32 %v44, %v46
    %v48 = vadd.f32 %v44, %v47
    %vm49 = vweird.f32 %v43
    %vm50 = vweird.f32 %v44
    %vm51 = vmor %vm49, %vm50
    %v52 = vsel %vm51, %v44, %v48
    %v53 = vand.u32 2147483647, %v43
    %vm54 = vcmp.eq.f32.partialorder %v53, 8.507059e+37
    %v55 = vand.u32 %v43, 2147483648
    %v56 = vor.u32 1.1754944e-38, %v55
    %v57 = vsel %vm54, %v56, %v52
    %v58 = vmul.f32 %v33, %v57
    %v59 = vmin.f32 %v58, 1.0
    %v60 = vmax.f32 %v59, -1.0
    %v61 = vmul.f32 %v20, %v20
    %v62 = vmin.f32 16.0, %v61
    %v63 = vmul.f32 %v62, 2.1237322e-06
    %v64 = vadd.f32 %v63, 0.00028619796
    %v65 = vmul.f32 %v62, %v64
    %v66 = vadd.f32 %v65, 0.0036580483
    %v67 = vmul.f32 %v62, %v66
    %v68 = vadd.f32 %v67, 0.05243302
    %v69 = vmul.f32 %v62, %v68
    %v70 = vadd.f32 %v69, 0.18741608
    %v71 = vmul.f32 %v62, %v70
    %v72 = vadd.f32 %v71, 1.1283791
    %v73 = vmul.f32 %v20, %v72
    %v74 = vmul.f32 %v62, 3.8918573e-05
    %v75 = vadd.f32 %v74, 0.001143296
    %v76 = vmul.f32 %v62, %v75
    %v77 = vadd.f32 %v76, 0.014752088
    %v78 = vmul.f32 %v62, %v77
    %v79 = vadd.f32 %v78, 0.112945676
    %v80 = vmul.f32 %v62, %v79
    %v81 = vadd.f32 %v80, 0.4994258
    %v82 = vmul.f32 %v62, %v81
    %v83 = vadd.f32 %v82, 1.0
    %v84 = vrcp.pop %v83
    %v85 = vmul.f32 %v83, %v84
    %v86 = vsub.f32 1.0, %v85
    %v87 = vmul.f32 %v84, %v86
    %v88 = vadd.f32 %v84, %v87
    %vm89 = vweird.f32 %v83
    %vm90 = vweird.f32 %v84
    %vm91 = vmor %vm89, %vm90
    %v92 = vsel %vm91, %v84, %v88
    %v93 = vand.u32 2147483647, %v83
    %vm94 = vcmp.eq.f32.partialorder %v93, 8.507059e+37
    %v95 = vand.u32 %v83, 2147483648
    %v96 = vor.u32 1.1754944e-38, %v95
    %v97 = vsel %vm94, %v96, %v92
    %v98 = vmul.f32 %v73, %v97
    %v99 = vmin.f32 %v98, 1.0
    %v100 = vmax.f32 %v99, -1.0
    %v101 = vmul.f32 %v17, %v60
    %v102 = vmul.f32 %v18, %v100
    %v103 = vadd.f32 %v101, %v17
    %v104 = vadd.f32 %v102, %v18
    %v105 = vld [vmem:[%s1] sm:$0xff]
    %v106 = vld [vmem:[%s1 + $0x8] sm:$0xff]
    %v107 = vld [vmem:[%s1 + $0x10] sm:$0xff]
    %v108 = vld [vmem:[%s1 + $0x18] sm:$0xff]
    %v109 = vld [vmem:[%s1 + $0x20] sm:$0xff]
    %v110 = vld [vmem:[%s1 + $0x28] sm:$0xff]
    %v111 = vld [vmem:[%s1 + $0x30] sm:$0xff]
    %v112 = vld [vmem:[%s1 + $0x38] sm:$0xff]
    %v113 = vld [vmem:[%s1 + $0x40] sm:$0xff]
    %v114 = vld [vmem:[%s1 + $0x48] sm:$0xff]
    %v115 = vld [vmem:[%s1 + $0x50] sm:$0xff]
    %v116 = vld [vmem:[%s1 + $0x58] sm:$0xff]
    %v117 = vld [vmem:[%s1 + $0x60] sm:$0xff]
    %v118 = vld [vmem:[%s1 + $0x68] sm:$0xff]
    %v119 = vld [vmem:[%s1 + $0x70] sm:$0xff]
    %v120 = vld [vmem:[%s1 + $0x78] sm:$0xff]
    %v121 = vld [vmem:[%s1 + $0x80] sm:$0xff]
    %v122 = vld [vmem:[%s1 + $0x88] sm:$0xff]
    %v123 = vld [vmem:[%s1 + $0x90] sm:$0xff]
    %v124 = vld [vmem:[%s1 + $0x98] sm:$0xff]
    %v125 = vld [vmem:[%s1 + $0xa0] sm:$0xff]
    %v126 = vld [vmem:[%s1 + $0xa8] sm:$0xff]
    %v127 = vld [vmem:[%s1 + $0xb0] sm:$0xff]
    %v128 = vld [vmem:[%s1 + $0xb8] sm:$0xff]
    %v129 = vld [vmem:[%s1 + $0xc0] sm:$0xff]
    %v130 = vld [vmem:[%s1 + $0xc8] sm:$0xff]
    %v131 = vld [vmem:[%s1 + $0xd0] sm:$0xff]
    %v132 = vld [vmem:[%s1 + $0xd8] sm:$0xff]
    %v133 = vld [vmem:[%s1 + $0xe0] sm:$0xff]
    %v134 = vld [vmem:[%s1 + $0xe8] sm:$0xff]
    %v135 = vld [vmem:[%s1 + $0xf0] sm:$0xff]
    %v136 = vld [vmem:[%s1 + $0xf8] sm:$0xff]
    %v137 = vld [vmem:[%s2] sm:$0x1]
    %v139 = vperm.slane %v137, 0
    %141 = vmatpush.msra.mxu0 %v120
    %142 = vmatpush.msra.mxu0 %v119
    %143 = vmatpush.msra.mxu0 %v118
    %144 = vmatpush.msra.mxu0 %v117
    %145 = vmatpush.msra.mxu0 %v116
    %146 = vmatpush.msra.mxu0 %v115
    %147 = vmatpush.msra.mxu0 %v114
    %148 = vmatpush.msra.mxu0 %v113
    %149 = vmatpush.msra.mxu0 %v112
    %150 = vmatpush.msra.mxu0 %v111
    %151 = vmatpush.msra.mxu0 %v110
    %152 = vmatpush.msra.mxu0 %v109
    %153 = vmatpush.msra.mxu0 %v108
    %154 = vmatpush.msra.mxu0 %v107
    %155 = vmatpush.msra.mxu0 %v106
    %156 = vmatpush.msra.mxu0 %v105
    %157 = vmatmul.f32.gmra.mxu0 %v15
    %v158 = vpop.f32.mrf.mxu0
    %v159 = vadd.f32 %v139, %v158
    %160 = vdwg.mxu0
    %161 = vmatpush.msra.mxu0 %v136
    %162 = vmatpush.msra.mxu0 %v135
    %163 = vmatpush.msra.mxu0 %v134
    %164 = vmatpush.msra.mxu0 %v133
    %165 = vmatpush.msra.mxu0 %v132
    %166 = vmatpush.msra.mxu0 %v131
    %167 = vmatpush.msra.mxu0 %v130
    %168 = vmatpush.msra.mxu0 %v129
    %169 = vmatpush.msra.mxu0 %v128
    %170 = vmatpush.msra.mxu0 %v127
    %171 = vmatpush.msra.mxu0 %v126
    %172 = vmatpush.msra.mxu0 %v125
    %173 = vmatpush.msra.mxu0 %v124
    %174 = vmatpush.msra.mxu0 %v123
    %175 = vmatpush.msra.mxu0 %v122
    %176 = vmatpush.msra.mxu0 %v121
    %177 = vmatmul.f32.gmra.mxu0 %v16
    %v178 = vpop.f32.mrf.mxu0
    %v179 = vadd.f32 %v159, %v178
    %180 = vdwg.mxu0
    %v181 = vmul.f32 %v179, 0.5
    %v182 = vmul.f32 %v179, 0.70710677
    %v183 = vmul.f32 %v182, %v182
    %v184 = vmin.f32 16.0, %v183
    %v185 = vmul.f32 %v184, 2.1237322e-06
    %v186 = vadd.f32 %v185, 0.00028619796
    %v187 = vmul.f32 %v184, %v186
    %v188 = vadd.f32 %v187, 0.0036580483
    %v189 = vmul.f32 %v184, %v188
    %v190 = vadd.f32 %v189, 0.05243302
    %v191 = vmul.f32 %v184, %v190
    %v192 = vadd.f32 %v191, 0.18741608
    %v193 = vmul.f32 %v184, %v192
    %v194 = vadd.f32 %v193, 1.1283791
    %v195 = vmul.f32 %v182, %v194
    %v196 = vmul.f32 %v184, 3.8918573e-05
    %v197 = vadd.f32 %v196, 0.001143296
    %v198 = vmul.f32 %v184, %v197
    %v199 = vadd.f32 %v198, 0.014752088
    %v200 = vmul.f32 %v184, %v199
    %v201 = vadd.f32 %v200, 0.112945676
    %v202 = vmul.f32 %v184, %v201
    %v203 = vadd.f32 %v202, 0.4994258
    %v204 = vmul.f32 %v184, %v203
    %v205 = vadd.f32 %v204, 1.0
    %v206 = vrcp.pop %v205
    %v207 = vmul.f32 %v205, %v206
    %v208 = vsub.f32 1.0, %v207
    %v209 = vmul.f32 %v206, %v208
    %v210 = vadd.f32 %v206, %v209
    %vm211 = vweird.f32 %v205
    %vm212 = vweird.f32 %v206
    %vm213 = vmor %vm211, %vm212
    %v214 = vsel %vm213, %v206, %v210
    %v215 = vand.u32 2147483647, %v205
    %vm216 = vcmp.eq.f32.partialorder %v215, 8.507059e+37
    %v217 = vand.u32 %v205, 2147483648
    %v218 = vor.u32 1.1754944e-38, %v217
    %v219 = vsel %vm216, %v218, %v214
    %v220 = vmul.f32 %v195, %v219
    %v221 = vmin.f32 %v220, 1.0
    %v222 = vmax.f32 %v221, -1.0
    %v223 = vmul.f32 %v181, %v222
    %v224 = vadd.f32 %v223, %v181
    %227 = vrot.lane.b32.xlu0 %v103, 10
    %v228 = vpop.permute.xlu0 %227
    %229 = vrot.lane.b32.xlu0 %v104, 10
    %v230 = vpop.permute.xlu0 %229
    %vm231 = vcmask 80896
    %v232 = vsel %vm231, %v228, %v230
    %v236 = vsel %vm231, %v224, %v228
    %237 = vst [vmem:[#allocation2] sm:$0xff] %v236
    %238 = vst [vmem:[#allocation2 + $0x8] sm:$0xff] %v232
    %239 = vst.msk [vmem:[#allocation2 + $0x10] sm:$0xff] %vm231, %v230
    // Predicated region
    $region14: #{tpu_custom_call.1} parent=1 // pred_check
      _
    $region15: #{tpu_custom_call.1} parent=1 // pred_check_branch
      %241 = sbr.rel (0) target = $region17
    $region16: #{tpu_custom_call.1} parent=1 // pred_region
      %243 = vsyncadd [#allocation3], 0
      %s245 = sshll.u32 [#allocation2], 4
      %s246 = int_to_ptr.vmem [resolvable:$true] %s245
      %s247 = sshll.u32 %s3, 4
      %s248 = int_to_ptr.hbm [resolvable:$true] %s247
      %250 = dma.vmem_to_hbm [thread:$0]  %s246, 384, %s248, [#allocation3]
    $region17: #{tpu_custom_call.1} parent=1 // pred_fallthru
      _
    // Predicated region
    $region18: #{tpu_custom_call.1} parent=1 // pred_check
      _
    $region19: #{tpu_custom_call.1} parent=1 // pred_check_branch
      %252 = sbr.rel (0) target = $region21
    $region20: #{tpu_custom_call.1} parent=1 // pred_region
      %254 = dma.done [#allocation3], 384
    $region21: #{tpu_custom_call.1} parent=1 // pred_fallthru
      _
    %255 = vsyncpa [#allocation3], 1

</llo_original>
